<compile_context>
chip_gen: v7x
topology: tpu7x:2x2x1
jax: 0.10.0
libtpu: 0.0.40
codegen_flags: <defaults>
</compile_context>

<pallas_src>
import jax
import jax.numpy as jnp
from jax.experimental import pallas as pl
from jax.experimental.pallas import tpu as pltpu

# ---------------------------------------------------------------------------
# Small, module-consistent sizes.
# ---------------------------------------------------------------------------
BATCH = 16        # number of texts (sublane-aligned: multiple of 8)
SEQ = 8           # fixed token length (char codes, padded/truncated)
VOCAB = 128       # ASCII char-code vocabulary
HIDDEN = 32       # embedding / output hidden size
HIDDEN_PAD = 128  # lane-dense padded hidden size for the kernel output


def tokenize(texts, seq_len=SEQ, vocab=VOCAB):
    """Deterministic host-side glue: strings -> [B, S] int32 char codes."""
    rows = []
    for t in texts:
        codes = [ord(c) % vocab for c in t[:seq_len]]
        codes = codes + [0] * (seq_len - len(codes))
        rows.append(codes)
    return jnp.asarray(rows, dtype=jnp.int32)


# ---------------------------------------------------------------------------
# Pallas kernel: S-unrolled one-hot count accumulation (VPU-only) followed by
# a single MXU matmul against the VMEM-resident lane-padded embedding table.
# ---------------------------------------------------------------------------
def text_encoder_kernel(tok_ref, emb_ref, out_ref):
    tok = tok_ref[...]                       # [B, S]    int32
    emb = emb_ref[...]                       # [V, Hpad] float32
    b, s = tok.shape
    v = emb.shape[0]

    # counts[b, v] = (1/S) * #{s : tok[b, s] == v}
    # Accumulate directly in [B, V] vreg layout: one hoisted iota, S static
    # compare+adds (VALU), one int->f32 convert, one scale.  No 3-D
    # intermediate, no XLU sublane reduce.
    vocab_iota = jax.lax.broadcasted_iota(jnp.int32, (b, v), 1)   # hoisted once
    acc = jnp.zeros((b, v), dtype=jnp.int32)
    for step in range(s):                    # static unroll, S = 8
        acc = acc + (vocab_iota == tok[:, step:step + 1]).astype(jnp.int32)
    counts = acc.astype(jnp.float32) * (1.0 / s)                  # [B, V] f32

    # Single MXU matmul: [B, V] @ [V, Hpad] -> [B, Hpad]; lane-dense store.
    out_ref[...] = jnp.dot(counts, emb, preferred_element_type=jnp.float32)


def text_encoder(tokens, emb_padded):
    """Single ungridded pallas_call: whole batch + resident table in VMEM.

    `emb_padded` must already be lane-padded to [V, HIDDEN_PAD] (done once at
    init).  Returns the padded [B, HIDDEN_PAD] slab; callers slice lazily.
    """
    b, _ = tokens.shape
    _, hp = emb_padded.shape
    return pl.pallas_call(
        text_encoder_kernel,
        out_shape=jax.ShapeDtypeStruct((b, hp), jnp.float32),
        in_specs=[
            pl.BlockSpec(memory_space=pltpu.MemorySpace.VMEM),   # tokens
            pl.BlockSpec(memory_space=pltpu.MemorySpace.VMEM),   # table
        ],
        out_specs=pl.BlockSpec(memory_space=pltpu.MemorySpace.VMEM),
    )(tokens, emb_padded)


if __name__ == "__main__":
    # Deterministic parameter init (the base module declares no parameters;
    # the synthetic encoder needs one embedding table).
    key = jax.random.PRNGKey(0)
    embedding = (jax.random.normal(key, (VOCAB, HIDDEN), dtype=jnp.float32)
                 * (1.0 / jnp.sqrt(HIDDEN)))

    # Pre-pad the table to 128 lanes ONCE at init (hoisted out of the call).
    emb_padded = jnp.pad(embedding, ((0, 0), (0, HIDDEN_PAD - HIDDEN)))

    texts = [f"sample text #{i} for the pallas tpu encoder" for i in range(BATCH)]
    texts[0] = "hello tpu"
    texts[1] = "pallas!"
    tokens = tokenize(texts)                                  # [16, 8] int32

    encode = jax.jit(text_encoder)
    out_padded = encode(tokens, emb_padded)                   # [16, 128] f32
    out_padded = jax.block_until_ready(out_padded)
    out = out_padded[:, :HIDDEN]                              # lazy consumer slice

    # Pure-JAX reference for the same synthetic forward.
    ref = jnp.take(embedding, tokens, axis=0).mean(axis=1)
    assert out.shape == (BATCH, HIDDEN)
    assert out.dtype == jnp.float32
    assert jnp.allclose(out, ref, atol=1e-5, rtol=1e-5)

    print("KERNEL_OK")
</pallas_src>

<mosaic_0001>
module attributes {stable_mosaic.version = 11 : i64} {
  func.func @text_encoder_kernel(%arg0: memref<16x8xi32, #tpu.memory_space<vmem>>, %arg1: memref<128x128xf32, #tpu.memory_space<vmem>>, %arg2: memref<16x128xf32, #tpu.memory_space<vmem>>) attributes {dimension_semantics = [], scalar_prefetch = 0 : i64, scratch_operands = 0 : i64, tpu.core_type = #tpu.core_type<tc>} {
    %c0 = arith.constant 0 : index
    %c0_0 = arith.constant 0 : index
    %0 = vector.load %arg0[%c0, %c0_0] : memref<16x8xi32, #tpu.memory_space<vmem>>, vector<16x8xi32>
    %c0_1 = arith.constant 0 : index
    %c0_2 = arith.constant 0 : index
    %1 = vector.load %arg1[%c0_1, %c0_2] : memref<128x128xf32, #tpu.memory_space<vmem>>, vector<128x128xf32>
    %2 = tpu.iota {dimensions = array<i32: 1>} : vector<16x128xi32>
    %c0_i32 = arith.constant 0 : i32
    %3 = vector.broadcast %c0_i32 : i32 to vector<16x128xi32>
    %4 = vector.extract_strided_slice %0 {offsets = [0, 0], sizes = [16, 1], strides = [1, 1]} : vector<16x8xi32> to vector<16x1xi32>
    %5 = vector.broadcast %4 : vector<16x1xi32> to vector<16x128xi32>
    %6 = arith.cmpi eq, %2, %5 : vector<16x128xi32>
    %7 = arith.extui %6 : vector<16x128xi1> to vector<16x128xi32>
    %8 = arith.addi %3, %7 : vector<16x128xi32>
    %9 = vector.extract_strided_slice %0 {offsets = [0, 1], sizes = [16, 1], strides = [1, 1]} : vector<16x8xi32> to vector<16x1xi32>
    %10 = vector.broadcast %9 : vector<16x1xi32> to vector<16x128xi32>
    %11 = arith.cmpi eq, %2, %10 : vector<16x128xi32>
    %12 = arith.extui %11 : vector<16x128xi1> to vector<16x128xi32>
    %13 = arith.addi %8, %12 : vector<16x128xi32>
    %14 = vector.extract_strided_slice %0 {offsets = [0, 2], sizes = [16, 1], strides = [1, 1]} : vector<16x8xi32> to vector<16x1xi32>
    %15 = vector.broadcast %14 : vector<16x1xi32> to vector<16x128xi32>
    %16 = arith.cmpi eq, %2, %15 : vector<16x128xi32>
    %17 = arith.extui %16 : vector<16x128xi1> to vector<16x128xi32>
    %18 = arith.addi %13, %17 : vector<16x128xi32>
    %19 = vector.extract_strided_slice %0 {offsets = [0, 3], sizes = [16, 1], strides = [1, 1]} : vector<16x8xi32> to vector<16x1xi32>
    %20 = vector.broadcast %19 : vector<16x1xi32> to vector<16x128xi32>
    %21 = arith.cmpi eq, %2, %20 : vector<16x128xi32>
    %22 = arith.extui %21 : vector<16x128xi1> to vector<16x128xi32>
    %23 = arith.addi %18, %22 : vector<16x128xi32>
    %24 = vector.extract_strided_slice %0 {offsets = [0, 4], sizes = [16, 1], strides = [1, 1]} : vector<16x8xi32> to vector<16x1xi32>
    %25 = vector.broadcast %24 : vector<16x1xi32> to vector<16x128xi32>
    %26 = arith.cmpi eq, %2, %25 : vector<16x128xi32>
    %27 = arith.extui %26 : vector<16x128xi1> to vector<16x128xi32>
    %28 = arith.addi %23, %27 : vector<16x128xi32>
    %29 = vector.extract_strided_slice %0 {offsets = [0, 5], sizes = [16, 1], strides = [1, 1]} : vector<16x8xi32> to vector<16x1xi32>
    %30 = vector.broadcast %29 : vector<16x1xi32> to vector<16x128xi32>
    %31 = arith.cmpi eq, %2, %30 : vector<16x128xi32>
    %32 = arith.extui %31 : vector<16x128xi1> to vector<16x128xi32>
    %33 = arith.addi %28, %32 : vector<16x128xi32>
    %34 = vector.extract_strided_slice %0 {offsets = [0, 6], sizes = [16, 1], strides = [1, 1]} : vector<16x8xi32> to vector<16x1xi32>
    %35 = vector.broadcast %34 : vector<16x1xi32> to vector<16x128xi32>
    %36 = arith.cmpi eq, %2, %35 : vector<16x128xi32>
    %37 = arith.extui %36 : vector<16x128xi1> to vector<16x128xi32>
    %38 = arith.addi %33, %37 : vector<16x128xi32>
    %39 = vector.extract_strided_slice %0 {offsets = [0, 7], sizes = [16, 1], strides = [1, 1]} : vector<16x8xi32> to vector<16x1xi32>
    %40 = vector.broadcast %39 : vector<16x1xi32> to vector<16x128xi32>
    %41 = arith.cmpi eq, %2, %40 : vector<16x128xi32>
    %42 = arith.extui %41 : vector<16x128xi1> to vector<16x128xi32>
    %43 = arith.addi %38, %42 : vector<16x128xi32>
    %44 = arith.sitofp %43 : vector<16x128xi32> to vector<16x128xf32>
    %cst = arith.constant 1.250000e-01 : f32
    %45 = vector.broadcast %cst : f32 to vector<16x128xf32>
    %46 = arith.mulf %44, %45 : vector<16x128xf32>
    %cst_3 = arith.constant dense<0.000000e+00> : vector<16x128xf32>
    %47 = tpu.matmul %46, %1, %cst_3 {dimension_numbers = #tpu.dot_dimension_numbers<[1], [0], [0], [1], [0, 0, 1, 1], [], []>} : vector<16x128xf32>, vector<128x128xf32>, vector<16x128xf32> -> vector<16x128xf32>
    %c0_4 = arith.constant 0 : index
    %c0_5 = arith.constant 0 : index
    %48 = vector.load %arg2[%c0_4, %c0_5] : memref<16x128xf32, #tpu.memory_space<vmem>>, vector<16x128xf32>
    tpu.vector_store %arg2[%c0_4, %c0_5], %47 {strides = array<i32>} : memref<16x128xf32, #tpu.memory_space<vmem>>, vector<16x128xf32>,
    return
  }
}

</mosaic_0001>

<llo_original>
// kernel: text_encoder.1
$region0: #{text_encoder.1}
  #allocation0 [shape = 'u32[]', space=smem, size = 0x4, offset = 0x4, fixed_abs, tag = 'smem constant byte address 0x4 - core index']
  #allocation1 [shape = 'u32[144,128]{1,0:T(1,128)}', space=vmem, size = 0x12000, scoped, tag = 'internal scratch']
  %s0 = inlined_call_operand.vmem [shape: s32[16,8], index: 0, kind: input, shape index: {}]
  %s1 = inlined_call_operand.hbm [shape: f32[128,128], index: 1, kind: input, shape index: {}]
  %s2 = inlined_call_operand.hbm [shape: f32[16,128], index: 2, kind: output, shape index: {}]
  %s3 = sld [smem:[#allocation0]]
  $region22: #{text_encoder.1} parent=0
    _
  %s5 = ssub.s32 1, %s3
  %s6 = scalar_select 0, %s5, %s3
  $region1: #{text_encoder.1} parent=0
    #allocation2 [shape = 'u8[65536]{0}', space=vmem, size = 0x10000, scoped, tag = 'input window, operand 1, single buffered']
    #allocation3 [shape = 's32[1]{0}', space=sflag, size = 0x4, scoped, tag = 'scoped memory for text_encoder.1']
    #allocation4 [shape = 's32[1]{0}', space=sflag, size = 0x4, scoped, tag = 'scoped memory for text_encoder.1']
    #allocation5 [shape = 'u8[8192]{0}', space=vmem, size = 0x2000, scoped, tag = 'output window, operand 0, single buffered']
    %7 = vsyncpa [#allocation3], 0
    %8 = vsyncpa [#allocation4], 0
    // Predicated region
    $region2: #{text_encoder.1} parent=1 // pred_check
      _
    $region3: #{text_encoder.1} parent=1 // pred_check_branch
      %10 = sbr.rel (0) target = $region5
    $region4: #{text_encoder.1} parent=1 // pred_region
      _
    $region5: #{text_encoder.1} parent=1 // pred_fallthru
      _
    // Predicated region
    $region6: #{text_encoder.1} parent=1 // pred_check
      _
    $region7: #{text_encoder.1} parent=1 // pred_check_branch
      %12 = sbr.rel (0) target = $region9
    $region8: #{text_encoder.1} parent=1 // pred_region
      %s14 = ssub.s32 2048, 2048
      %15 = vsyncadd [#allocation3], %s14
      %s16 = sshll.u32 [#allocation2], 4
      %s17 = int_to_ptr.vmem [resolvable:$true] %s16
      %22 = dma.hbm_to_vmem [thread:$0]  %s1, 2048, %s17, [#allocation3], 128, 128, 8
    $region9: #{text_encoder.1} parent=1 // pred_fallthru
      _
    // Predicated region
    $region10: #{text_encoder.1} parent=1 // pred_check
      _
    $region11: #{text_encoder.1} parent=1 // pred_check_branch
      %24 = sbr.rel (0) target = $region13
    $region12: #{text_encoder.1} parent=1 // pred_region
      %25 = dma.done [#allocation3], 2048
    $region13: #{text_encoder.1} parent=1 // pred_fallthru
      _
    %v26 = vld [vmem:[%s0] sm:$0xff]
    %v27 = vld [vmem:[%s0 + $0x8] sm:$0xff]
    %v28 = vld [vmem:[#allocation2] sm:$0xff]
    %v29 = vld [vmem:[#allocation2 + $0x8] sm:$0xff]
    %v30 = vld [vmem:[#allocation2 + $0x10] sm:$0xff]
    %v31 = vld [vmem:[#allocation2 + $0x18] sm:$0xff]
    %v32 = vld [vmem:[#allocation2 + $0x20] sm:$0xff]
    %v33 = vld [vmem:[#allocation2 + $0x28] sm:$0xff]
    %v34 = vld [vmem:[#allocation2 + $0x30] sm:$0xff]
    %v35 = vld [vmem:[#allocation2 + $0x38] sm:$0xff]
    %v36 = vld [vmem:[#allocation2 + $0x40] sm:$0xff]
    %v37 = vld [vmem:[#allocation2 + $0x48] sm:$0xff]
    %v38 = vld [vmem:[#allocation2 + $0x50] sm:$0xff]
    %v39 = vld [vmem:[#allocation2 + $0x58] sm:$0xff]
    %v40 = vld [vmem:[#allocation2 + $0x60] sm:$0xff]
    %v41 = vld [vmem:[#allocation2 + $0x68] sm:$0xff]
    %v42 = vld [vmem:[#allocation2 + $0x70] sm:$0xff]
    %v43 = vld [vmem:[#allocation2 + $0x78] sm:$0xff]
    %v44 = vlaneseq
    %v45 = vand.u32 %v44, 127
    %46 = vset.pattern.permute.xlu0 0
    %47 = vperm.xlu0 %46, %v26
    %v48 = vpop.permute.xlu0 %47
    %49 = vset.pattern.permute.xlu0 0
    %50 = vperm.xlu0 %49, %v27
    %v51 = vpop.permute.xlu0 %50
    %vm52 = vcmp.eq.s32.totalorder %v45, %v48
    %vm53 = vcmp.eq.s32.totalorder %v45, %v51
    %v54 = vsel %vm52, 1, 0
    %v55 = vsel %vm53, 1, 0
    %56 = vset.pattern.permute.xlu0 1
    %57 = vperm.xlu0 %56, %v26
    %v58 = vpop.permute.xlu0 %57
    %59 = vset.pattern.permute.xlu0 1
    %60 = vperm.xlu0 %59, %v27
    %v61 = vpop.permute.xlu0 %60
    %vm62 = vcmp.eq.s32.totalorder %v45, %v58
    %vm63 = vcmp.eq.s32.totalorder %v45, %v61
    %v64 = vsel %vm62, 1, 0
    %v65 = vsel %vm63, 1, 0
    %v66 = vadd.s32 %v54, %v64
    %v67 = vadd.s32 %v55, %v65
    %68 = vset.pattern.permute.xlu0 2
    %69 = vperm.xlu0 %68, %v26
    %v70 = vpop.permute.xlu0 %69
    %71 = vset.pattern.permute.xlu0 2
    %72 = vperm.xlu0 %71, %v27
    %v73 = vpop.permute.xlu0 %72
    %vm74 = vcmp.eq.s32.totalorder %v45, %v70
    %vm75 = vcmp.eq.s32.totalorder %v45, %v73
    %v76 = vsel %vm74, 1, 0
    %v77 = vsel %vm75, 1, 0
    %v78 = vadd.s32 %v66, %v76
    %v79 = vadd.s32 %v67, %v77
    %80 = vset.pattern.permute.xlu0 3
    %81 = vperm.xlu0 %80, %v26
    %v82 = vpop.permute.xlu0 %81
    %83 = vset.pattern.permute.xlu0 3
    %84 = vperm.xlu0 %83, %v27
    %v85 = vpop.permute.xlu0 %84
    %vm86 = vcmp.eq.s32.totalorder %v45, %v82
    %vm87 = vcmp.eq.s32.totalorder %v45, %v85
    %v88 = vsel %vm86, 1, 0
    %v89 = vsel %vm87, 1, 0
    %v90 = vadd.s32 %v78, %v88
    %v91 = vadd.s32 %v79, %v89
    %92 = vset.pattern.permute.xlu0 4
    %93 = vperm.xlu0 %92, %v26
    %v94 = vpop.permute.xlu0 %93
    %95 = vset.pattern.permute.xlu0 4
    %96 = vperm.xlu0 %95, %v27
    %v97 = vpop.permute.xlu0 %96
    %vm98 = vcmp.eq.s32.totalorder %v45, %v94
    %vm99 = vcmp.eq.s32.totalorder %v45, %v97
    %v100 = vsel %vm98, 1, 0
    %v101 = vsel %vm99, 1, 0
    %v102 = vadd.s32 %v90, %v100
    %v103 = vadd.s32 %v91, %v101
    %104 = vset.pattern.permute.xlu0 5
    %105 = vperm.xlu0 %104, %v26
    %v106 = vpop.permute.xlu0 %105
    %107 = vset.pattern.permute.xlu0 5
    %108 = vperm.xlu0 %107, %v27
    %v109 = vpop.permute.xlu0 %108
    %vm110 = vcmp.eq.s32.totalorder %v45, %v106
    %vm111 = vcmp.eq.s32.totalorder %v45, %v109
    %v112 = vsel %vm110, 1, 0
    %v113 = vsel %vm111, 1, 0
    %v114 = vadd.s32 %v102, %v112
    %v115 = vadd.s32 %v103, %v113
    %116 = vset.pattern.permute.xlu0 6
    %117 = vperm.xlu0 %116, %v26
    %v118 = vpop.permute.xlu0 %117
    %119 = vset.pattern.permute.xlu0 6
    %120 = vperm.xlu0 %119, %v27
    %v121 = vpop.permute.xlu0 %120
    %vm122 = vcmp.eq.s32.totalorder %v45, %v118
    %vm123 = vcmp.eq.s32.totalorder %v45, %v121
    %v124 = vsel %vm122, 1, 0
    %v125 = vsel %vm123, 1, 0
    %v126 = vadd.s32 %v114, %v124
    %v127 = vadd.s32 %v115, %v125
    %128 = vset.pattern.permute.xlu0 7
    %129 = vperm.xlu0 %128, %v26
    %v130 = vpop.permute.xlu0 %129
    %131 = vset.pattern.permute.xlu0 7
    %132 = vperm.xlu0 %131, %v27
    %v133 = vpop.permute.xlu0 %132
    %vm134 = vcmp.eq.s32.totalorder %v45, %v130
    %vm135 = vcmp.eq.s32.totalorder %v45, %v133
    %v136 = vsel %vm134, 1, 0
    %v137 = vsel %vm135, 1, 0
    %v138 = vadd.s32 %v126, %v136
    %v139 = vadd.s32 %v127, %v137
    %v140 = vcvt.s32.f32 %v138
    %v141 = vcvt.s32.f32 %v139
    %v142 = vmul.f32 %v140, 0.125
    %v143 = vmul.f32 %v141, 0.125
    %144 = vmatprep.subr.mxu0 0.0
    %145 = vmatpush1.msra.mxu0 %v28
    %146 = vmatprep.subr.mxu0 0.0
    %147 = vmatpush1.msra.mxu0 %v29
    %148 = vmatprep.subr.mxu0 0.0
    %149 = vmatpush1.msra.mxu0 %v30
    %150 = vmatprep.subr.mxu0 0.0
    %151 = vmatpush1.msra.mxu0 %v31
    %152 = vmatprep.subr.mxu0 0.0
    %153 = vmatpush1.msra.mxu0 %v32
    %154 = vmatprep.subr.mxu0 0.0
    %155 = vmatpush1.msra.mxu0 %v33
    %156 = vmatprep.subr.mxu0 0.0
    %157 = vmatpush1.msra.mxu0 %v34
    %158 = vmatprep.subr.mxu0 0.0
    %159 = vmatpush1.msra.mxu0 %v35
    %160 = vmatprep.subr.mxu0 0.0
    %161 = vmatpush1.msra.mxu0 %v36
    %162 = vmatprep.subr.mxu0 0.0
    %163 = vmatpush1.msra.mxu0 %v37
    %164 = vmatprep.subr.mxu0 0.0
    %165 = vmatpush1.msra.mxu0 %v38
    %166 = vmatprep.subr.mxu0 0.0
    %167 = vmatpush1.msra.mxu0 %v39
    %168 = vmatprep.subr.mxu0 0.0
    %169 = vmatpush1.msra.mxu0 %v40
    %170 = vmatprep.subr.mxu0 0.0
    %171 = vmatpush1.msra.mxu0 %v41
    %172 = vmatprep.subr.mxu0 0.0
    %173 = vmatpush1.msra.mxu0 %v42
    %174 = vmatprep.subr.mxu0 0.0
    %175 = vmatpush1.msra.mxu0 %v43
    %176 = vmatprep.subr.mxu0 0.0
    %177 = vmatpush1.msra.mxu0 0.0
    %178 = vmatprep.subr.mxu0 0.0
    %179 = vmatpush1.msra.mxu0 0.0
    %180 = vmatprep.subr.mxu0 0.0
    %181 = vmatpush1.msra.mxu0 0.0
    %182 = vmatprep.subr.mxu0 0.0
    %183 = vmatpush1.msra.mxu0 0.0
    %184 = vmatprep.subr.mxu0 0.0
    %185 = vmatpush1.msra.mxu0 0.0
    %186 = vmatprep.subr.mxu0 0.0
    %187 = vmatpush1.msra.mxu0 0.0
    %188 = vmatprep.subr.mxu0 0.0
    %189 = vmatpush1.msra.mxu0 0.0
    %190 = vmatprep.subr.mxu0 0.0
    %191 = vmatpush1.msra.mxu0 0.0
    %192 = vmatprep.subr.mxu0 0.0
    %193 = vmatpush1.msra.mxu0 0.0
    %194 = vmatprep.subr.mxu0 0.0
    %195 = vmatpush1.msra.mxu0 0.0
    %196 = vmatprep.subr.mxu0 0.0
    %197 = vmatpush1.msra.mxu0 0.0
    %198 = vmatprep.subr.mxu0 0.0
    %199 = vmatpush1.msra.mxu0 0.0
    %200 = vmatprep.subr.mxu0 0.0
    %201 = vmatpush1.msra.mxu0 0.0
    %202 = vmatprep.subr.mxu0 0.0
    %203 = vmatpush1.msra.mxu0 0.0
    %204 = vmatprep.subr.mxu0 0.0
    %205 = vmatpush1.msra.mxu0 0.0
    %206 = vmatprep.subr.mxu0 0.0
    %207 = vmatpush1.msra.mxu0 0.0
    %208 = vmatprep.mubr.f32.mxu0 0.0
    %209 = vmatmul.mubr.f32.gmra.mrb[0].mxu0 %v142
    %v210 = vpop.f32.mrb[0].mxu0
    %v211 = vadd.f32 0.0, %v210
    %v212 = vpop.f32.mrb[0].mxu0
    %213 = vmatprep.mubr.f32.mxu0 0.0
    %214 = vmatmul.mubr.f32.gmra.mrb[0].mxu0 %v143
    %v215 = vpop.f32.mrb[0].mxu0
    %v216 = vadd.f32 0.0, %v215
    %v217 = vpop.f32.mrb[0].mxu0
    %218 = vdwg.mxu0
    %219 = vst [vmem:[#allocation5] sm:$0xff] %v211
    %220 = vst [vmem:[#allocation5 + $0x8] sm:$0xff] %v216
    // Predicated region
    $region14: #{text_encoder.1} parent=1 // pred_check
      _
    $region15: #{text_encoder.1} parent=1 // pred_check_branch
      %222 = sbr.rel (0) target = $region17
    $region16: #{text_encoder.1} parent=1 // pred_region
      %s224 = ssub.s32 256, 256
      %225 = vsyncadd [#allocation4], %s224
      %s226 = sshll.u32 [#allocation5], 4
      %s227 = int_to_ptr.vmem [resolvable:$true] %s226
      %232 = dma.vmem_to_hbm [thread:$0]  %s227, 256, %s2, [#allocation4], 128, 128, 8
    $region17: #{text_encoder.1} parent=1 // pred_fallthru
      _
    // Predicated region
    $region18: #{text_encoder.1} parent=1 // pred_check
      _
    $region19: #{text_encoder.1} parent=1 // pred_check_branch
      %234 = sbr.rel (0) target = $region21
    $region20: #{text_encoder.1} parent=1 // pred_region
      %235 = dma.done [#allocation4], 256
    $region21: #{text_encoder.1} parent=1 // pred_fallthru
      _
    %236 = vsyncpa [#allocation3], 1
    %237 = vsyncpa [#allocation4], 1

</llo_original>
